<compile_context>
chip_gen: v6e
topology: v6e:2x2x1
jax: 0.10.0
libtpu: 0.0.40
codegen_flags: <defaults>
</compile_context>

<pallas_src>
import functools
import math

import jax
import jax.numpy as jnp
from jax.experimental import pallas as pl
from jax.experimental.pallas import tpu as pltpu


def _adaptive_maxpool_kernel(x_ref, o_ref, *, sqrt_L, out_h, out_w, n_chunks):
    """Pool TB batch elements (all image chunks) per grid step.

    x_ref: (TB, n_chunks * L, dim)   with L == sqrt_L * sqrt_L (channels-last)
    o_ref: (TB, n_chunks * out_h * out_w, dim)

    Adaptive pooling windows follow PyTorch semantics:
        start = floor(i * H / OH), end = ceil((i + 1) * H / OH)
    All offsets are compile-time constants, so every window is a static ref
    slice of contiguous token rows + a sublane max reduction.
    """
    L = sqrt_L * sqrt_L
    out_len = out_h * out_w
    for c in range(n_chunks):
        in_base = c * L
        out_base = c * out_len
        for i in range(out_h):
            hs = (i * sqrt_L) // out_h
            he = -(-((i + 1) * sqrt_L) // out_h)        # ceil
            for j in range(out_w):
                ws = (j * sqrt_L) // out_w
                we = -(-((j + 1) * sqrt_L) // out_w)    # ceil
                acc = None
                for h in range(hs, he):
                    s0 = in_base + h * sqrt_L + ws
                    seg = x_ref[:, s0:s0 + (we - ws), :]      # (TB, kw, dim)
                    m = jnp.max(seg, axis=1, keepdims=True)   # (TB, 1, dim)
                    acc = m if acc is None else jnp.maximum(acc, m)
                o = out_base + i * out_w + j
                o_ref[:, o:o + 1, :] = acc                    # direct row store


def _largest_divisor_at_most(n, cap):
    cap = max(1, min(int(cap), n))
    for d in range(cap, 0, -1):
        if n % d == 0:
            return d
    return 1


def adaptive_max_pool_tokens(x, output_size, *, n_chunks=1,
                             block_bytes_target=4 * 1024 * 1024):
    """x: (B, n_chunks * L, dim); each chunk of L tokens is a square grid.

    Returns (B, n_chunks * oh * ow, dim); chunk c's pooled tokens occupy
    output[:, c*oh*ow:(c+1)*oh*ow, :] (matches PyTorch's chunk/cat ordering).
    """
    B, L_total, dim = x.shape
    assert L_total % n_chunks == 0
    L = L_total // n_chunks
    sqrt_L = int(round(math.sqrt(L)))
    assert sqrt_L * sqrt_L == L, "tokens per chunk must form a square grid"
    oh, ow = output_size
    out_len = oh * ow
    dtype_bytes = jnp.dtype(x.dtype).itemsize

    # Batch several elements per grid step (mem-bound kernel: bigger tiles ->
    # closer to HBM roofline), but keep double-buffered blocks a few MiB so
    # the default scoped-VMEM limit is fine on every TPU generation.
    per_elem_bytes = (L_total + n_chunks * out_len) * dim * dtype_bytes
    tb = _largest_divisor_at_most(
        B, max(1, block_bytes_target // max(1, per_elem_bytes)))
    # Keep at least 2 grid steps when possible so "parallel" semantics can
    # spread work across both TensorCores on v7x.
    if B // tb < 2 and tb > 1:
        tb = _largest_divisor_at_most(B, tb // 2)

    kernel = functools.partial(_adaptive_maxpool_kernel, sqrt_L=sqrt_L,
                               out_h=oh, out_w=ow, n_chunks=n_chunks)

    bytes_accessed = B * (L_total + n_chunks * out_len) * dim * dtype_bytes
    cost = pl.CostEstimate(flops=B * L_total * dim, transcendentals=0,
                           bytes_accessed=bytes_accessed)

    # Block shapes use the full token/dim extents, so no (8,128) divisibility
    # or remainder-masking issues at any shape; only B is tiled (tb | B).
    return pl.pallas_call(
        kernel,
        out_shape=jax.ShapeDtypeStruct((B, n_chunks * out_len, dim), x.dtype),
        grid=(B // tb,),
        in_specs=[pl.BlockSpec((tb, L_total, dim), lambda b: (b, 0, 0))],
        out_specs=pl.BlockSpec((tb, n_chunks * out_len, dim),
                               lambda b: (b, 0, 0)),
        compiler_params=pltpu.CompilerParams(
            dimension_semantics=("parallel",)),
        cost_estimate=cost,
    )(x)


# ---------------------------------------------------------------------------
# Module-equivalent wrapper (glue in plain JAX, hot path in the Pallas kernel)
# ---------------------------------------------------------------------------
class Downsample:
    def __init__(self, output_size):
        # nn.AdaptiveMaxPool2d has no learnable parameters.
        self.output_size = output_size

    def downsample_inputs(self, inputs, n_chunks=1):
        return adaptive_max_pool_tokens(inputs, self.output_size,
                                        n_chunks=n_chunks)

    def __call__(self, inputs_tuple):
        oh, ow = self.output_size
        k = oh * ow
        if len(inputs_tuple) == 4:
            inputs, boxes, img_order_ids, obj_order_ids = inputs_tuple
            L_half = inputs.shape[1] // 2

            # Both image chunks are pooled in a single pallas_call; the chunk
            # selection lives in the kernel's static offsets, so no
            # split/concat copies of the activation tensor are made.
            pooled = self.downsample_inputs(inputs, n_chunks=2)  # (B, 2k, dim)

            # Metadata shuffle is equivalent to taking the first k tokens of
            # each chunk and concatenating (cheap slices of small tensors).
            def shuffle(t):
                return jnp.concatenate(
                    [t[:, :k], t[:, L_half:L_half + k]], axis=1)

            return (pooled, shuffle(boxes), shuffle(img_order_ids),
                    shuffle(obj_order_ids))
        else:
            inputs, boxes = inputs_tuple
            pooled = self.downsample_inputs(inputs, n_chunks=1)
            boxes = boxes[:, :pooled.shape[1]]
            return (pooled, boxes)


# ---------------------------------------------------------------------------
# Pure-JAX reference (mirrors PyTorch exactly) for checking.
# ---------------------------------------------------------------------------
def _ref_adaptive_max_pool_tokens(x, output_size):
    B, L, dim = x.shape
    s = int(round(math.sqrt(L)))
    oh, ow = output_size
    xi = jnp.transpose(x, (0, 2, 1)).reshape(B, dim, s, s)  # NCHW
    rows = []
    for i in range(oh):
        hs, he = (i * s) // oh, -(-((i + 1) * s) // oh)
        cols = []
        for j in range(ow):
            ws, we = (j * s) // ow, -(-((j + 1) * s) // ow)
            cols.append(jnp.max(xi[:, :, hs:he, ws:we], axis=(2, 3)))
        rows.append(jnp.stack(cols, axis=-1))
    pooled = jnp.stack(rows, axis=-2).reshape(B, dim, oh * ow)
    return jnp.transpose(pooled, (0, 2, 1))


def _ref_forward_4tuple(inputs, boxes, img_ids, obj_ids, output_size):
    inputs2 = jnp.concatenate(jnp.split(inputs, 2, axis=1), axis=0)
    inputs2 = _ref_adaptive_max_pool_tokens(inputs2, output_size)
    inputs2 = jnp.concatenate(jnp.split(inputs2, 2, axis=0), axis=1)
    half = inputs2.shape[1] // 2

    def shuffle(t):
        t2 = jnp.concatenate(jnp.split(t, 2, axis=1), axis=0)
        t2 = t2[:, :half]
        return jnp.concatenate(jnp.split(t2, 2, axis=0), axis=1)

    return inputs2, shuffle(boxes), shuffle(img_ids), shuffle(obj_ids)


if __name__ == "__main__":
    key = jax.random.PRNGKey(0)
    k1, k2, k3, k4, k5, k6 = jax.random.split(key, 6)

    # ---- 4-tuple branch: two image chunks of 16 tokens (4x4 grid) each ----
    B, L_total, dim = 2, 32, 32
    output_size = (2, 2)
    inputs = jax.random.normal(k1, (B, L_total, dim), dtype=jnp.float32)
    boxes = jax.random.uniform(k2, (B, L_total, 4), dtype=jnp.float32)
    img_order_ids = jax.random.randint(k3, (B, L_total), 0, 2, dtype=jnp.int32)
    obj_order_ids = jax.random.randint(k4, (B, L_total), 0, L_total,
                                       dtype=jnp.int32)

    model = Downsample(output_size)
    out_inputs, out_boxes, out_img, out_obj = model(
        (inputs, boxes, img_order_ids, obj_order_ids))
    jax.block_until_ready(out_inputs)

    ref_inputs, ref_boxes, ref_img, ref_obj = _ref_forward_4tuple(
        inputs, boxes, img_order_ids, obj_order_ids, output_size)
    assert out_inputs.shape == (B, 2 * output_size[0] * output_size[1], dim)
    assert jnp.allclose(out_inputs, ref_inputs, atol=1e-6, rtol=1e-6)
    assert jnp.allclose(out_boxes, ref_boxes)
    assert jnp.array_equal(out_img, ref_img)
    assert jnp.array_equal(out_obj, ref_obj)

    # ---- 2-tuple branch with overlapping adaptive windows (5x5 -> 2x2) ----
    B2, L2, dim2 = 4, 25, 128
    x2 = jax.random.normal(k5, (B2, L2, dim2), dtype=jnp.float32)
    b2 = jax.random.uniform(k6, (B2, L2, 4), dtype=jnp.float32)
    out2_x, out2_b = model((x2, b2))
    jax.block_until_ready(out2_x)
    ref2 = _ref_adaptive_max_pool_tokens(x2, output_size)
    assert out2_x.shape == (B2, output_size[0] * output_size[1], dim2)
    assert jnp.allclose(out2_x, ref2, atol=1e-6, rtol=1e-6)
    assert jnp.allclose(out2_b, b2[:, :out2_x.shape[1]])

    # ---- bf16 stays bf16 end-to-end (max is exact; HBM bytes halved) ----
    x_bf16 = x2.astype(jnp.bfloat16)
    pooled_bf16 = adaptive_max_pool_tokens(x_bf16, output_size)
    jax.block_until_ready(pooled_bf16)
    assert pooled_bf16.dtype == jnp.bfloat16
    assert jnp.array_equal(pooled_bf16,
                           _ref_adaptive_max_pool_tokens(x_bf16, output_size))

    print("KERNEL_OK")
</pallas_src>

<mosaic_0001>
module attributes {stable_mosaic.version = 11 : i64} {
  func.func @_adaptive_maxpool_kernel(%arg0: i32, %arg1: memref<1x32x32xf32, #tpu.memory_space<vmem>>, %arg2: memref<1x8x32xf32, #tpu.memory_space<vmem>>) attributes {dimension_semantics = [#tpu.dimension_semantics<parallel>], iteration_bounds = array<i64: 2>, scalar_prefetch = 0 : i64, scratch_operands = 0 : i64, tpu.core_type = #tpu.core_type<tc>, window_params = [{transform_indices = @transform_0, window_bounds = array<i64: 1, 32, 32>}, {transform_indices = @transform_1, window_bounds = array<i64: 1, 8, 32>}]} {
    %c0 = arith.constant 0 : index
    %c0_0 = arith.constant 0 : index
    %c0_1 = arith.constant 0 : index
    %0 = vector.load %arg1[%c0, %c0_0, %c0_1] : memref<1x32x32xf32, #tpu.memory_space<vmem>>, vector<1x2x32xf32>
    %cst = arith.constant dense<0xFF800000> : vector<1x32xf32>
    %1 = vector.multi_reduction <maximumf>, %0, %cst [1] : vector<1x2x32xf32> to vector<1x32xf32>
    %2 = vector.shape_cast %1 : vector<1x32xf32> to vector<1x1x32xf32>
    %c0_2 = arith.constant 0 : index
    %c4 = arith.constant 4 : index
    %c0_3 = arith.constant 0 : index
    %3 = vector.load %arg1[%c0_2, %c4, %c0_3] : memref<1x32x32xf32, #tpu.memory_space<vmem>>, vector<1x2x32xf32>
    %cst_4 = arith.constant dense<0xFF800000> : vector<1x32xf32>
    %4 = vector.multi_reduction <maximumf>, %3, %cst_4 [1] : vector<1x2x32xf32> to vector<1x32xf32>
    %5 = vector.shape_cast %4 : vector<1x32xf32> to vector<1x1x32xf32>
    %6 = arith.maximumf %2, %5 : vector<1x1x32xf32>
    %c0_5 = arith.constant 0 : index
    %c0_6 = arith.constant 0 : index
    %c0_7 = arith.constant 0 : index
    %7 = vector.load %arg2[%c0_5, %c0_6, %c0_7] : memref<1x8x32xf32, #tpu.memory_space<vmem>>, vector<1x1x32xf32>
    tpu.vector_store %arg2[%c0_5, %c0_6, %c0_7], %6 {strides = array<i32>} : memref<1x8x32xf32, #tpu.memory_space<vmem>>, vector<1x1x32xf32>,
    %c0_8 = arith.constant 0 : index
    %c2 = arith.constant 2 : index
    %c0_9 = arith.constant 0 : index
    %8 = vector.load %arg1[%c0_8, %c2, %c0_9] : memref<1x32x32xf32, #tpu.memory_space<vmem>>, vector<1x2x32xf32>
    %cst_10 = arith.constant dense<0xFF800000> : vector<1x32xf32>
    %9 = vector.multi_reduction <maximumf>, %8, %cst_10 [1] : vector<1x2x32xf32> to vector<1x32xf32>
    %10 = vector.shape_cast %9 : vector<1x32xf32> to vector<1x1x32xf32>
    %c0_11 = arith.constant 0 : index
    %c6 = arith.constant 6 : index
    %c0_12 = arith.constant 0 : index
    %11 = vector.load %arg1[%c0_11, %c6, %c0_12] : memref<1x32x32xf32, #tpu.memory_space<vmem>>, vector<1x2x32xf32>
    %cst_13 = arith.constant dense<0xFF800000> : vector<1x32xf32>
    %12 = vector.multi_reduction <maximumf>, %11, %cst_13 [1] : vector<1x2x32xf32> to vector<1x32xf32>
    %13 = vector.shape_cast %12 : vector<1x32xf32> to vector<1x1x32xf32>
    %14 = arith.maximumf %10, %13 : vector<1x1x32xf32>
    %c0_14 = arith.constant 0 : index
    %c1 = arith.constant 1 : index
    %c0_15 = arith.constant 0 : index
    %15 = vector.load %arg2[%c0_14, %c1, %c0_15] : memref<1x8x32xf32, #tpu.memory_space<vmem>>, vector<1x1x32xf32>
    tpu.vector_store %arg2[%c0_14, %c1, %c0_15], %14 {strides = array<i32>} : memref<1x8x32xf32, #tpu.memory_space<vmem>>, vector<1x1x32xf32>,
    %c0_16 = arith.constant 0 : index
    %c8 = arith.constant 8 : index
    %c0_17 = arith.constant 0 : index
    %16 = vector.load %arg1[%c0_16, %c8, %c0_17] : memref<1x32x32xf32, #tpu.memory_space<vmem>>, vector<1x2x32xf32>
    %cst_18 = arith.constant dense<0xFF800000> : vector<1x32xf32>
    %17 = vector.multi_reduction <maximumf>, %16, %cst_18 [1] : vector<1x2x32xf32> to vector<1x32xf32>
    %18 = vector.shape_cast %17 : vector<1x32xf32> to vector<1x1x32xf32>
    %c0_19 = arith.constant 0 : index
    %c12 = arith.constant 12 : index
    %c0_20 = arith.constant 0 : index
    %19 = vector.load %arg1[%c0_19, %c12, %c0_20] : memref<1x32x32xf32, #tpu.memory_space<vmem>>, vector<1x2x32xf32>
    %cst_21 = arith.constant dense<0xFF800000> : vector<1x32xf32>
    %20 = vector.multi_reduction <maximumf>, %19, %cst_21 [1] : vector<1x2x32xf32> to vector<1x32xf32>
    %21 = vector.shape_cast %20 : vector<1x32xf32> to vector<1x1x32xf32>
    %22 = arith.maximumf %18, %21 : vector<1x1x32xf32>
    %c0_22 = arith.constant 0 : index
    %c2_23 = arith.constant 2 : index
    %c0_24 = arith.constant 0 : index
    %23 = vector.load %arg2[%c0_22, %c2_23, %c0_24] : memref<1x8x32xf32, #tpu.memory_space<vmem>>, vector<1x1x32xf32>
    tpu.vector_store %arg2[%c0_22, %c2_23, %c0_24], %22 {strides = array<i32>} : memref<1x8x32xf32, #tpu.memory_space<vmem>>, vector<1x1x32xf32>,
    %c0_25 = arith.constant 0 : index
    %c10 = arith.constant 10 : index
    %c0_26 = arith.constant 0 : index
    %24 = vector.load %arg1[%c0_25, %c10, %c0_26] : memref<1x32x32xf32, #tpu.memory_space<vmem>>, vector<1x2x32xf32>
    %cst_27 = arith.constant dense<0xFF800000> : vector<1x32xf32>
    %25 = vector.multi_reduction <maximumf>, %24, %cst_27 [1] : vector<1x2x32xf32> to vector<1x32xf32>
    %26 = vector.shape_cast %25 : vector<1x32xf32> to vector<1x1x32xf32>
    %c0_28 = arith.constant 0 : index
    %c14 = arith.constant 14 : index
    %c0_29 = arith.constant 0 : index
    %27 = vector.load %arg1[%c0_28, %c14, %c0_29] : memref<1x32x32xf32, #tpu.memory_space<vmem>>, vector<1x2x32xf32>
    %cst_30 = arith.constant dense<0xFF800000> : vector<1x32xf32>
    %28 = vector.multi_reduction <maximumf>, %27, %cst_30 [1] : vector<1x2x32xf32> to vector<1x32xf32>
    %29 = vector.shape_cast %28 : vector<1x32xf32> to vector<1x1x32xf32>
    %30 = arith.maximumf %26, %29 : vector<1x1x32xf32>
    %c0_31 = arith.constant 0 : index
    %c3 = arith.constant 3 : index
    %c0_32 = arith.constant 0 : index
    %31 = vector.load %arg2[%c0_31, %c3, %c0_32] : memref<1x8x32xf32, #tpu.memory_space<vmem>>, vector<1x1x32xf32>
    tpu.vector_store %arg2[%c0_31, %c3, %c0_32], %30 {strides = array<i32>} : memref<1x8x32xf32, #tpu.memory_space<vmem>>, vector<1x1x32xf32>,
    %c0_33 = arith.constant 0 : index
    %c16 = arith.constant 16 : index
    %c0_34 = arith.constant 0 : index
    %32 = vector.load %arg1[%c0_33, %c16, %c0_34] : memref<1x32x32xf32, #tpu.memory_space<vmem>>, vector<1x2x32xf32>
    %cst_35 = arith.constant dense<0xFF800000> : vector<1x32xf32>
    %33 = vector.multi_reduction <maximumf>, %32, %cst_35 [1] : vector<1x2x32xf32> to vector<1x32xf32>
    %34 = vector.shape_cast %33 : vector<1x32xf32> to vector<1x1x32xf32>
    %c0_36 = arith.constant 0 : index
    %c20 = arith.constant 20 : index
    %c0_37 = arith.constant 0 : index
    %35 = vector.load %arg1[%c0_36, %c20, %c0_37] : memref<1x32x32xf32, #tpu.memory_space<vmem>>, vector<1x2x32xf32>
    %cst_38 = arith.constant dense<0xFF800000> : vector<1x32xf32>
    %36 = vector.multi_reduction <maximumf>, %35, %cst_38 [1] : vector<1x2x32xf32> to vector<1x32xf32>
    %37 = vector.shape_cast %36 : vector<1x32xf32> to vector<1x1x32xf32>
    %38 = arith.maximumf %34, %37 : vector<1x1x32xf32>
    %c0_39 = arith.constant 0 : index
    %c4_40 = arith.constant 4 : index
    %c0_41 = arith.constant 0 : index
    %39 = vector.load %arg2[%c0_39, %c4_40, %c0_41] : memref<1x8x32xf32, #tpu.memory_space<vmem>>, vector<1x1x32xf32>
    tpu.vector_store %arg2[%c0_39, %c4_40, %c0_41], %38 {strides = array<i32>} : memref<1x8x32xf32, #tpu.memory_space<vmem>>, vector<1x1x32xf32>,
    %c0_42 = arith.constant 0 : index
    %c18 = arith.constant 18 : index
    %c0_43 = arith.constant 0 : index
    %40 = vector.load %arg1[%c0_42, %c18, %c0_43] : memref<1x32x32xf32, #tpu.memory_space<vmem>>, vector<1x2x32xf32>
    %cst_44 = arith.constant dense<0xFF800000> : vector<1x32xf32>
    %41 = vector.multi_reduction <maximumf>, %40, %cst_44 [1] : vector<1x2x32xf32> to vector<1x32xf32>
    %42 = vector.shape_cast %41 : vector<1x32xf32> to vector<1x1x32xf32>
    %c0_45 = arith.constant 0 : index
    %c22 = arith.constant 22 : index
    %c0_46 = arith.constant 0 : index
    %43 = vector.load %arg1[%c0_45, %c22, %c0_46] : memref<1x32x32xf32, #tpu.memory_space<vmem>>, vector<1x2x32xf32>
    %cst_47 = arith.constant dense<0xFF800000> : vector<1x32xf32>
    %44 = vector.multi_reduction <maximumf>, %43, %cst_47 [1] : vector<1x2x32xf32> to vector<1x32xf32>
    %45 = vector.shape_cast %44 : vector<1x32xf32> to vector<1x1x32xf32>
    %46 = arith.maximumf %42, %45 : vector<1x1x32xf32>
    %c0_48 = arith.constant 0 : index
    %c5 = arith.constant 5 : index
    %c0_49 = arith.constant 0 : index
    %47 = vector.load %arg2[%c0_48, %c5, %c0_49] : memref<1x8x32xf32, #tpu.memory_space<vmem>>, vector<1x1x32xf32>
    tpu.vector_store %arg2[%c0_48, %c5, %c0_49], %46 {strides = array<i32>} : memref<1x8x32xf32, #tpu.memory_space<vmem>>, vector<1x1x32xf32>,
    %c0_50 = arith.constant 0 : index
    %c24 = arith.constant 24 : index
    %c0_51 = arith.constant 0 : index
    %48 = vector.load %arg1[%c0_50, %c24, %c0_51] : memref<1x32x32xf32, #tpu.memory_space<vmem>>, vector<1x2x32xf32>
    %cst_52 = arith.constant dense<0xFF800000> : vector<1x32xf32>
    %49 = vector.multi_reduction <maximumf>, %48, %cst_52 [1] : vector<1x2x32xf32> to vector<1x32xf32>
    %50 = vector.shape_cast %49 : vector<1x32xf32> to vector<1x1x32xf32>
    %c0_53 = arith.constant 0 : index
    %c28 = arith.constant 28 : index
    %c0_54 = arith.constant 0 : index
    %51 = vector.load %arg1[%c0_53, %c28, %c0_54] : memref<1x32x32xf32, #tpu.memory_space<vmem>>, vector<1x2x32xf32>
    %cst_55 = arith.constant dense<0xFF800000> : vector<1x32xf32>
    %52 = vector.multi_reduction <maximumf>, %51, %cst_55 [1] : vector<1x2x32xf32> to vector<1x32xf32>
    %53 = vector.shape_cast %52 : vector<1x32xf32> to vector<1x1x32xf32>
    %54 = arith.maximumf %50, %53 : vector<1x1x32xf32>
    %c0_56 = arith.constant 0 : index
    %c6_57 = arith.constant 6 : index
    %c0_58 = arith.constant 0 : index
    %55 = vector.load %arg2[%c0_56, %c6_57, %c0_58] : memref<1x8x32xf32, #tpu.memory_space<vmem>>, vector<1x1x32xf32>
    tpu.vector_store %arg2[%c0_56, %c6_57, %c0_58], %54 {strides = array<i32>} : memref<1x8x32xf32, #tpu.memory_space<vmem>>, vector<1x1x32xf32>,
    %c0_59 = arith.constant 0 : index
    %c26 = arith.constant 26 : index
    %c0_60 = arith.constant 0 : index
    %56 = vector.load %arg1[%c0_59, %c26, %c0_60] : memref<1x32x32xf32, #tpu.memory_space<vmem>>, vector<1x2x32xf32>
    %cst_61 = arith.constant dense<0xFF800000> : vector<1x32xf32>
    %57 = vector.multi_reduction <maximumf>, %56, %cst_61 [1] : vector<1x2x32xf32> to vector<1x32xf32>
    %58 = vector.shape_cast %57 : vector<1x32xf32> to vector<1x1x32xf32>
    %c0_62 = arith.constant 0 : index
    %c30 = arith.constant 30 : index
    %c0_63 = arith.constant 0 : index
    %59 = vector.load %arg1[%c0_62, %c30, %c0_63] : memref<1x32x32xf32, #tpu.memory_space<vmem>>, vector<1x2x32xf32>
    %cst_64 = arith.constant dense<0xFF800000> : vector<1x32xf32>
    %60 = vector.multi_reduction <maximumf>, %59, %cst_64 [1] : vector<1x2x32xf32> to vector<1x32xf32>
    %61 = vector.shape_cast %60 : vector<1x32xf32> to vector<1x1x32xf32>
    %62 = arith.maximumf %58, %61 : vector<1x1x32xf32>
    %c0_65 = arith.constant 0 : index
    %c7 = arith.constant 7 : index
    %c0_66 = arith.constant 0 : index
    %63 = vector.load %arg2[%c0_65, %c7, %c0_66] : memref<1x8x32xf32, #tpu.memory_space<vmem>>, vector<1x1x32xf32>
    tpu.vector_store %arg2[%c0_65, %c7, %c0_66], %62 {strides = array<i32>} : memref<1x8x32xf32, #tpu.memory_space<vmem>>, vector<1x1x32xf32>,
    return
  }
  func.func @transform_0(%arg0: i32) -> (i32, i32, i32) {
    %c0_i32 = arith.constant 0 : i32
    %c0_i32_0 = arith.constant 0 : i32
    %c0_i32_1 = arith.constant 0 : i32
    return %arg0, %c0_i32, %c0_i32_0 : i32, i32, i32
  }
  func.func @transform_1(%arg0: i32) -> (i32, i32, i32) {
    %c0_i32 = arith.constant 0 : i32
    %c0_i32_0 = arith.constant 0 : i32
    %c0_i32_1 = arith.constant 0 : i32
    return %arg0, %c0_i32, %c0_i32_0 : i32, i32, i32
  }
}

</mosaic_0001>

<llo_original>
// kernel: tpu_custom_call.1
$region0: #{tpu_custom_call.1}
  #allocation0 [shape = 'u32[]', space=smem, size = 0x4, offset = 0x4, fixed_abs, tag = 'smem constant byte address 0x4 - core index']
  #allocation1 [shape = 'u32[144,128]{1,0:T(1,128)}', space=vmem, size = 0x12000, scoped, tag = 'internal scratch']
  %s0 = inlined_call_operand.hbm [shape: f32[2,32,32], index: 0, kind: input, shape index: {}]
  %s1 = inlined_call_operand.hbm [shape: f32[2,8,32], index: 1, kind: output, shape index: {}]
  %s2 = sld [smem:[#allocation0]]
  $region41: #{tpu_custom_call.1} parent=0
    _
  %s4 = ssub.s32 1, %s2
  %s5 = scalar_select 0, %s4, %s2
  $region1: #{tpu_custom_call.1} parent=0
    #allocation2 [shape = 'u8[32768]{0}', space=vmem, size = 0x8000, scoped, tag = 'input window, operand 0']
    #allocation3 [shape = 's32[2]{0}', space=sflag, size = 0x8, scoped, tag = 'scoped memory for tpu_custom_call.1']
    #allocation4 [shape = 's32[2]{0}', space=sflag, size = 0x8, scoped, tag = 'scoped memory for tpu_custom_call.1']
    #allocation5 [shape = 'u8[8192]{0}', space=vmem, size = 0x2000, scoped, tag = 'output window, operand 0']
    %6 = vsyncpa [#allocation3], 0
    %s7 = scalar_lea.sflag [#allocation3], 1
    %8 = vsyncpa %s7, 0
    %9 = vsyncpa [#allocation4], 0
    %s10 = scalar_lea.sflag [#allocation4], 1
    %11 = vsyncpa %s10, 0
    loop: start=0, step=1, limit=4
    $region2: #{tpu_custom_call.1} parent=1 // loop_pre_header
      _
    $region3: #{tpu_custom_call.1} parent=1 // loop_header
      %s13 = sphi 0, %s17
      %p14 = scmp.ge.s32.totalorder %s13, 4
      %s23 = sphi 0, %s25
      %s26 = sphi 0, %s23
      %s27 = sphi 0, %s26
      %s43 = sphi 0, %s27
      %s49 = sphi 0, %s51
      %s52 = sphi 0, %s49
      %s53 = sphi 0, %s52
      %s69 = sphi 0, %s53
    $region4: #{tpu_custom_call.1} parent=1 // loop_header_branch
      %16 = sbr.rel (%p14) target = $region8
    $region5: #{tpu_custom_call.1} parent=1 // loop_body
      %s18 = ssub.s32 %s13, 1
      %s19 = ssub.s32 %s13, 2
      %s20 = sadd.s32 %s13, 1
      %s21 = ssub.s32 %s13, %s20
      %p22 = scmp.eq.s32.totalorder %s21, 0
      %s24 = sadd.s32 %s23, 1
      %s25 = scalar_select %p22, %s23, %s24
      %p28 = pneg %p22
      %p29 = scmp.eq.s32.totalorder %s13, 1
      %p30 = por %p28, %p29
      %p31 = scmp.ne.s32.totalorder %s23, %s26
      %p32 = scmp.eq.s32.totalorder %s13, 0
      %p33 = por %p31, %p32
      %p34 = scmp.ne.s32.totalorder %s23, %s26
      %p35 = scmp.eq.s32.totalorder %s18, 1
      %p36 = por %p34, %p35
      %p37 = scmp.ne.s32.totalorder %s26, %s27
      %p38 = scmp.eq.s32.totalorder %s18, 0
      %p39 = por %p37, %p38
      %p40 = scmp.ne.s32.totalorder %s26, %s27
      %p41 = scmp.eq.s32.totalorder %s19, 1
      %p42 = por %p40, %p41
      %p44 = scmp.ne.s32.totalorder %s27, %s43
      %p45 = scmp.eq.s32.totalorder %s19, 0
      %p46 = por %p44, %p45
      %s47 = ssub.s32 %s13, %s20
      %p48 = scmp.eq.s32.totalorder %s47, 0
      %s50 = sadd.s32 %s49, 1
      %s51 = scalar_select %p48, %s49, %s50
      %p54 = pneg %p48
      %p55 = scmp.eq.s32.totalorder %s13, 1
      %p56 = por %p54, %p55
      %p57 = scmp.ne.s32.totalorder %s49, %s52
      %p58 = scmp.eq.s32.totalorder %s13, 0
      %p59 = por %p57, %p58
      %p60 = scmp.ne.s32.totalorder %s49, %s52
      %p61 = scmp.eq.s32.totalorder %s18, 1
      %p62 = por %p60, %p61
      %p63 = scmp.ne.s32.totalorder %s52, %s53
      %p64 = scmp.eq.s32.totalorder %s18, 0
      %p65 = por %p63, %p64
      %p66 = scmp.ne.s32.totalorder %s52, %s53
      %p67 = scmp.eq.s32.totalorder %s19, 1
      %p68 = por %p66, %p67
      %p70 = scmp.ne.s32.totalorder %s53, %s69
      %p71 = scmp.eq.s32.totalorder %s19, 0
      %p72 = por %p70, %p71
      %p73 = scmp.le.s32.totalorder 1, %s13
      %p74 = scmp.lt.s32.totalorder %s13, 3
      %p75 = pnand %p73, %p74
      %p76 = pneg %p75
      // Predicated region
      $region9: #{tpu_custom_call.1} parent=5 // pred_check
        _
      $region10: #{tpu_custom_call.1} parent=5 // pred_check_branch
        %78 = sbr.rel (%p75) target = $region12
      $region11: #{tpu_custom_call.1} parent=5 // pred_region
        %s79 = ssub.s32 %s13, 1
      $region12: #{tpu_custom_call.1} parent=5 // pred_fallthru
        _
      %p80 = scmp.lt.s32.totalorder %s13, 2
      // Predicated region
      $region13: #{tpu_custom_call.1} parent=5 // pred_check
        %p81 = pneg %p80
      $region14: #{tpu_custom_call.1} parent=5 // pred_check_branch
        %83 = sbr.rel (%p81) target = $region16
      $region15: #{tpu_custom_call.1} parent=5 // pred_region
        // Predicated region
        $region17: #{tpu_custom_call.1} parent=15 // pred_check
          %p84 = pneg %p33
        $region18: #{tpu_custom_call.1} parent=15 // pred_check_branch
          %86 = sbr.rel (%p84) target = $region20
        $region19: #{tpu_custom_call.1} parent=15 // pred_region
          %s87 = sand.u32 %s23, 1
          %s88 = scalar_lea.sflag [#allocation3], %s87
          %s89 = sand.u32 %s23, 1
          %s90 = smul.addr %s89, 32
          %s91 = scalar_lea.vmem [#allocation2], %s90
          %s93 = ssub.s32 512, 512
          %94 = vsyncadd %s88, %s93
          %s95 = smul.addr %s13, 4
          %s96 = smul.addr %s95, 128
          %s97 = scalar_lea.hbm %s0, %s96
          %s98 = sshll.u32 %s91, 4
          %s99 = int_to_ptr.vmem [resolvable:$true] %s98
          %104 = dma.hbm_to_vmem [thread:$0]  %s97, 512, %s99, %s88, 128, 128, 8
        $region20: #{tpu_custom_call.1} parent=15 // pred_fallthru
          _
      $region16: #{tpu_custom_call.1} parent=5 // pred_fallthru
        _
      %p105 = scmp.le.s32.totalorder 1, %s13
      %p106 = scmp.lt.s32.totalorder %s13, 3
      %p107 = pnand %p105, %p106
      %p108 = pneg %p107
      // Predicated region
      $region21: #{tpu_custom_call.1} parent=5 // pred_check
        _
      $region22: #{tpu_custom_call.1} parent=5 // pred_check_branch
        %110 = sbr.rel (%p107) target = $region24
      $region23: #{tpu_custom_call.1} parent=5 // pred_region
        %s111 = ssub.s32 %s13, 1
        %s112 = sand.u32 %s26, 1
        %s113 = scalar_lea.sflag [#allocation3], %s112
        %s114 = sand.u32 %s26, 1
        %s115 = smul.addr %s114, 32
        %s116 = scalar_lea.vmem [#allocation2], %s115
        // Predicated region
        $region25: #{tpu_custom_call.1} parent=23 // pred_check
          %p117 = pneg %p39
        $region26: #{tpu_custom_call.1} parent=23 // pred_check_branch
          %119 = sbr.rel (%p117) target = $region28
        $region27: #{tpu_custom_call.1} parent=23 // pred_region
          %120 = dma.done %s113, 512
        $region28: #{tpu_custom_call.1} parent=23 // pred_fallthru
          _
        %s121 = sand.u32 %s26, 1
        %s122 = scalar_lea.sflag [#allocation3], %s121
        %s123 = sand.u32 %s26, 1
        %s124 = smul.addr %s123, 32
        %s125 = scalar_lea.vmem [#allocation2], %s124
        %p126 = pneg %p39
        %p127 = pneg %p36
        %p128 = pneg %p65
        %p129 = pneg %p62
        %s130 = sand.u32 %s52, 1
        %s131 = scalar_lea.sflag [#allocation4], %s130
        %s132 = sand.u32 %s52, 1
        %s133 = smul.addr %s132, 8
        %s134 = scalar_lea.vmem [#allocation5], %s133
        %v135 = vld [vmem:[%s116] sm:$0x3]
        %vm136 = vcmask 254976
        %v137 = vsel %vm136, %v135, -inf
        %v138 = vrot.slane %v137, 4
        %v139 = vmax.f32 %v137, %v138
        %v140 = vrot.slane %v139, 2
        %v141 = vmax.f32 %v139, %v140
        %v142 = vrot.slane %v141, 1
        %v143 = vmax.f32 %v141, %v142
        %v144 = vld [vmem:[%s116 + $0x4] sm:$0x3]
        %v145 = vsel %vm136, %v144, -inf
        %v146 = vrot.slane %v145, 4
        %v147 = vmax.f32 %v145, %v146
        %v148 = vrot.slane %v147, 2
        %v149 = vmax.f32 %v147, %v148
        %v150 = vrot.slane %v149, 1
        %v151 = vmax.f32 %v149, %v150
        %v152 = vmax.f32 %v143, %v151
        %vm153 = vcmask 253952
        %154 = vst.msk [vmem:[%s134] sm:$0x1] %vm153, %v152
        %v155 = vld [vmem:[%s116 + $0x2] sm:$0x3]
        %v156 = vsel %vm136, %v155, -inf
        %v157 = vrot.slane %v156, 4
        %v158 = vmax.f32 %v156, %v157
        %v159 = vrot.slane %v158, 2
        %v160 = vmax.f32 %v158, %v159
        %v161 = vrot.slane %v160, 1
        %v162 = vmax.f32 %v160, %v161
        %v163 = vld [vmem:[%s116 + $0x6] sm:$0x3]
        %v164 = vsel %vm136, %v163, -inf
        %v165 = vrot.slane %v164, 4
        %v166 = vmax.f32 %v164, %v165
        %v167 = vrot.slane %v166, 2
        %v168 = vmax.f32 %v166, %v167
        %v169 = vrot.slane %v168, 1
        %v170 = vmax.f32 %v168, %v169
        %v171 = vmax.f32 %v162, %v170
        %172 = vst.msk [vmem:[%s134 + $0x1] sm:$0x1] %vm153, %v171
        %v173 = vld [vmem:[%s116 + $0x8] sm:$0x3]
        %v174 = vsel %vm136, %v173, -inf
        %v175 = vrot.slane %v174, 4
        %v176 = vmax.f32 %v174, %v175
        %v177 = vrot.slane %v176, 2
        %v178 = vmax.f32 %v176, %v177
        %v179 = vrot.slane %v178, 1
        %v180 = vmax.f32 %v178, %v179
        %v181 = vld [vmem:[%s116 + $0xc] sm:$0x3]
        %v182 = vsel %vm136, %v181, -inf
        %v183 = vrot.slane %v182, 4
        %v184 = vmax.f32 %v182, %v183
        %v185 = vrot.slane %v184, 2
        %v186 = vmax.f32 %v184, %v185
        %v187 = vrot.slane %v186, 1
        %v188 = vmax.f32 %v186, %v187
        %v189 = vmax.f32 %v180, %v188
        %190 = vst.msk [vmem:[%s134 + $0x2] sm:$0x1] %vm153, %v189
        %v191 = vld [vmem:[%s116 + $0xa] sm:$0x3]
        %v192 = vsel %vm136, %v191, -inf
        %v193 = vrot.slane %v192, 4
        %v194 = vmax.f32 %v192, %v193
        %v195 = vrot.slane %v194, 2
        %v196 = vmax.f32 %v194, %v195
        %v197 = vrot.slane %v196, 1
        %v198 = vmax.f32 %v196, %v197
        %v199 = vld [vmem:[%s116 + $0xe] sm:$0x3]
        %v200 = vsel %vm136, %v199, -inf
        %v201 = vrot.slane %v200, 4
        %v202 = vmax.f32 %v200, %v201
        %v203 = vrot.slane %v202, 2
        %v204 = vmax.f32 %v202, %v203
        %v205 = vrot.slane %v204, 1
        %v206 = vmax.f32 %v204, %v205
        %v207 = vmax.f32 %v198, %v206
        %208 = vst.msk [vmem:[%s134 + $0x3] sm:$0x1] %vm153, %v207
        %v209 = vld [vmem:[%s116 + $0x10] sm:$0x3]
        %v210 = vsel %vm136, %v209, -inf
        %v211 = vrot.slane %v210, 4
        %v212 = vmax.f32 %v210, %v211
        %v213 = vrot.slane %v212, 2
        %v214 = vmax.f32 %v212, %v213
        %v215 = vrot.slane %v214, 1
        %v216 = vmax.f32 %v214, %v215
        %v217 = vld [vmem:[%s116 + $0x14] sm:$0x3]
        %v218 = vsel %vm136, %v217, -inf
        %v219 = vrot.slane %v218, 4
        %v220 = vmax.f32 %v218, %v219
        %v221 = vrot.slane %v220, 2
        %v222 = vmax.f32 %v220, %v221
        %v223 = vrot.slane %v222, 1
        %v224 = vmax.f32 %v222, %v223
        %v225 = vmax.f32 %v216, %v224
        %226 = vst.msk [vmem:[%s134 + $0x4] sm:$0x1] %vm153, %v225
        %v227 = vld [vmem:[%s116 + $0x12] sm:$0x3]
        %v228 = vsel %vm136, %v227, -inf
        %v229 = vrot.slane %v228, 4
        %v230 = vmax.f32 %v228, %v229
        %v231 = vrot.slane %v230, 2
        %v232 = vmax.f32 %v230, %v231
        %v233 = vrot.slane %v232, 1
        %v234 = vmax.f32 %v232, %v233
        %v235 = vld [vmem:[%s116 + $0x16] sm:$0x3]
        %v236 = vsel %vm136, %v235, -inf
        %v237 = vrot.slane %v236, 4
        %v238 = vmax.f32 %v236, %v237
        %v239 = vrot.slane %v238, 2
        %v240 = vmax.f32 %v238, %v239
        %v241 = vrot.slane %v240, 1
        %v242 = vmax.f32 %v240, %v241
        %v243 = vmax.f32 %v234, %v242
        %244 = vst.msk [vmem:[%s134 + $0x5] sm:$0x1] %vm153, %v243
        %v245 = vld [vmem:[%s116 + $0x18] sm:$0x3]
        %v246 = vsel %vm136, %v245, -inf
        %v247 = vrot.slane %v246, 4
        %v248 = vmax.f32 %v246, %v247
        %v249 = vrot.slane %v248, 2
        %v250 = vmax.f32 %v248, %v249
        %v251 = vrot.slane %v250, 1
        %v252 = vmax.f32 %v250, %v251
        %v253 = vld [vmem:[%s116 + $0x1c] sm:$0x3]
        %v254 = vsel %vm136, %v253, -inf
        %v255 = vrot.slane %v254, 4
        %v256 = vmax.f32 %v254, %v255
        %v257 = vrot.slane %v256, 2
        %v258 = vmax.f32 %v256, %v257
        %v259 = vrot.slane %v258, 1
        %v260 = vmax.f32 %v258, %v259
        %v261 = vmax.f32 %v252, %v260
        %262 = vst.msk [vmem:[%s134 + $0x6] sm:$0x1] %vm153, %v261
        %v263 = vld [vmem:[%s116 + $0x1a] sm:$0x3]
        %v264 = vsel %vm136, %v263, -inf
        %v265 = vrot.slane %v264, 4
        %v266 = vmax.f32 %v264, %v265
        %v267 = vrot.slane %v266, 2
        %v268 = vmax.f32 %v266, %v267
        %v269 = vrot.slane %v268, 1
        %v270 = vmax.f32 %v268, %v269
        %v271 = vld [vmem:[%s116 + $0x1e] sm:$0x3]
        %v272 = vsel %vm136, %v271, -inf
        %v273 = vrot.slane %v272, 4
        %v274 = vmax.f32 %v272, %v273
        %v275 = vrot.slane %v274, 2
        %v276 = vmax.f32 %v274, %v275
        %v277 = vrot.slane %v276, 1
        %v278 = vmax.f32 %v276, %v277
        %v279 = vmax.f32 %v270, %v278
        %280 = vst.msk [vmem:[%s134 + $0x7] sm:$0x1] %vm153, %v279
        %s281 = sand.u32 %s52, 1
        %s282 = scalar_lea.sflag [#allocation4], %s281
        %s283 = sand.u32 %s52, 1
        %s284 = smul.addr %s283, 8
        %s285 = scalar_lea.vmem [#allocation5], %s284
        // Predicated region
        $region29: #{tpu_custom_call.1} parent=23 // pred_check
          %p286 = pneg %p62
        $region30: #{tpu_custom_call.1} parent=23 // pred_check_branch
          %288 = sbr.rel (%p286) target = $region32
        $region31: #{tpu_custom_call.1} parent=23 // pred_region
          %s290 = ssub.s32 128, 128
          %291 = vsyncadd %s282, %s290
          %s292 = smul.addr %s18, 128
          %s293 = scalar_lea.hbm %s1, %s292
          %s295 = sshll.u32 %s285, 4
          %s296 = int_to_ptr.vmem [resolvable:$true] %s295
          %298 = dma.vmem_to_hbm [thread:$0]  %s296, 128, %s293, %s282
        $region32: #{tpu_custom_call.1} parent=23 // pred_fallthru
          _
      $region24: #{tpu_custom_call.1} parent=5 // pred_fallthru
        _
      %p299 = scmp.le.s32.totalorder 2, %s13
      // Predicated region
      $region33: #{tpu_custom_call.1} parent=5 // pred_check
        %p300 = pneg %p299
      $region34: #{tpu_custom_call.1} parent=5 // pred_check_branch
        %302 = sbr.rel (%p300) target = $region36
      $region35: #{tpu_custom_call.1} parent=5 // pred_region
        %s303 = ssub.s32 %s13, 2
        // Predicated region
        $region37: #{tpu_custom_call.1} parent=35 // pred_check
          %p304 = pneg %p68
        $region38: #{tpu_custom_call.1} parent=35 // pred_check_branch
          %306 = sbr.rel (%p304) target = $region40
        $region39: #{tpu_custom_call.1} parent=35 // pred_region
          %s307 = sand.u32 %s53, 1
          %s308 = scalar_lea.sflag [#allocation4], %s307
          %s309 = sand.u32 %s53, 1
          %s310 = smul.addr %s309, 8
          %s311 = scalar_lea.vmem [#allocation5], %s310
          %312 = dma.done %s308, 128
        $region40: #{tpu_custom_call.1} parent=35 // pred_fallthru
          _
      $region36: #{tpu_custom_call.1} parent=5 // pred_fallthru
        _
    $region6: #{tpu_custom_call.1} parent=1 // loop_footer
      %s17 = sadd.s32 1, %s13
    $region7: #{tpu_custom_call.1} parent=1 // loop_footer_branch
      %12 = sbr.rel target = $region3
    $region8: #{tpu_custom_call.1} parent=1 // loop_exit
      _
    %313 = vsyncpa [#allocation3], 1
    %s314 = scalar_lea.sflag [#allocation3], 1
    %315 = vsyncpa %s314, 1
    %316 = vsyncpa [#allocation4], 1
    %s317 = scalar_lea.sflag [#allocation4], 1
    %318 = vsyncpa %s317, 1

</llo_original>
